<compile_context>
chip_gen: v7x
topology: tpu7x:2x2x1
jax: 0.10.0
libtpu: 0.0.40
codegen_flags: <defaults>
</compile_context>

<pallas_src>
import jax
import jax.numpy as jnp
import numpy as np
from jax import lax
from jax.experimental import pallas as pl
from jax.experimental.pallas import tpu as pltpu


# ----------------------------------------------------------------------------
# plain-JAX glue: bilinear interpolation, align_corners=True (F.interpolate)
# ----------------------------------------------------------------------------
def bilinear_resize_align_corners(x_nchw, out_hw):
    # TODO(synk): if production H,W grow, replace the double jnp.take gather with two
    # small dense interpolation matrices applied as matmuls (MXU-friendly, fuses better).
    B, C, H, W = x_nchw.shape
    oh, ow = out_hw

    def src_coords(o, i):
        if o == 1:
            return jnp.zeros((o,), jnp.float32)
        return jnp.arange(o, dtype=jnp.float32) * ((i - 1) / (o - 1))

    sy = src_coords(oh, H)
    sx = src_coords(ow, W)
    y0 = jnp.floor(sy).astype(jnp.int32)
    y1 = jnp.minimum(y0 + 1, H - 1)
    x0 = jnp.floor(sx).astype(jnp.int32)
    x1 = jnp.minimum(x0 + 1, W - 1)
    wy = (sy - y0.astype(jnp.float32))[:, None]   # [oh,1]
    wx = (sx - x0.astype(jnp.float32))[None, :]   # [1,ow]

    def gather_hw(img, yi, xi):
        g = jnp.take(img, yi, axis=2)
        g = jnp.take(g, xi, axis=3)
        return g

    v00 = gather_hw(x_nchw, y0, x0)
    v01 = gather_hw(x_nchw, y0, x1)
    v10 = gather_hw(x_nchw, y1, x0)
    v11 = gather_hw(x_nchw, y1, x1)
    top = v00 * (1.0 - wx) + v01 * wx
    bot = v10 * (1.0 - wx) + v11 * wx
    return top * (1.0 - wy) + bot * wy


# ----------------------------------------------------------------------------
# tiny gated branch: sigmoid(conv1x1_{3->1}(relu(conv3x3_{3->3,pad=1}(residual_x))))
# Kept in plain JAX per the performance reviews (lane-sparse in Pallas; relayout +
# fixed call overhead would exceed the work at 3 channels).
# ----------------------------------------------------------------------------
def gated_branch(residual_x, w1, w2):
    conv1 = lax.conv_general_dilated(
        residual_x, w1, window_strides=(1, 1), padding=((1, 1), (1, 1)),
        dimension_numbers=("NCHW", "OIHW", "NCHW"))
    conv2 = lax.conv_general_dilated(
        jnp.maximum(conv1, 0.0), w2, window_strides=(1, 1), padding="VALID",
        dimension_numbers=("NCHW", "OIHW", "NCHW"))
    return jax.nn.sigmoid(conv2)                        # [B, 1, h, w]


# ----------------------------------------------------------------------------
# Pallas kernel: fused  res_map * relu(W_bn @ emb + bias_bn) + emb   (NCHW native)
#   emb_ref : [depth, t_hw]  (native dtype)   w_ref   : [depth, depth] (BN folded)
#   bias_ref: [depth, 1] f32                  rmap_ref: [1, t_hw] f32
#   out_ref : [depth, t_hw]  (native dtype)
# ----------------------------------------------------------------------------
def fused_attn_kernel(emb_ref, w_ref, bias_ref, rmap_ref, out_ref):
    emb = emb_ref[...]
    hx = jnp.dot(w_ref[...], emb, preferred_element_type=jnp.float32)   # 1x1 conv on MXU
    hx = jnp.maximum(hx + bias_ref[...], 0.0)                           # folded BN bias + ReLU
    out = rmap_ref[...] * hx + emb.astype(jnp.float32)                  # gate + dropout(emb)==emb
    out_ref[...] = out.astype(out_ref.dtype)


# ----------------------------------------------------------------------------
# generation-aware VMEM budgeting / tile selection
# ----------------------------------------------------------------------------
def _vmem_budget_bytes():
    """~5/8 of physical VMEM: 80 MiB on v5e/v6e (128 MiB), 40 MiB on v7x (64 MiB),
    leaving headroom for Mosaic scratch; conservative 20 MiB fallback if unknown."""
    try:
        info = pltpu.get_tpu_info()
        cap = int(getattr(info, "vmem_capacity_bytes", 32 * 1024 * 1024))
    except Exception:
        cap = 32 * 1024 * 1024
    return (cap * 5) // 8


def _round_up(x, m):
    return ((x + m - 1) // m) * m


def _pick_hw_tile(hw, depth, elem_bytes, budget_bytes, batch):
    """Largest 128-multiple lane tile whose working set fits `budget_bytes`.
    Prefers an exact divisor of hw (no padding pass); otherwise the caller uses
    grid = cdiv(hw, tile) with a small zero-pad.  Never falls back to full hw."""
    weight_resident = depth * depth * elem_bytes + depth * 4      # single-buffered W + bias
    per_lane = (2 * depth * elem_bytes        # emb tile, double-buffered
                + 2 * depth * elem_bytes      # out tile, double-buffered
                + 4 * depth * 4               # f32 temporaries inside the body
                + 2 * 4)                      # res_map gate (f32), double-buffered
    avail = max(budget_bytes - weight_resident, per_lane * 128)
    t_cap = max(128, (avail // per_lane) // 128 * 128)
    hw_ceil = _round_up(hw, 128)
    t_cap = min(t_cap, hw_ceil)

    best_div = 0
    t = 128
    while t <= min(hw, t_cap):
        if hw % t == 0:
            best_div = t
        t += 128
    if best_div == t_cap or best_div >= max(512, t_cap // 2):
        tile = best_div
    else:
        tile = t_cap

    # v7x has 2 TensorCores sharding the "parallel" axes: ensure >= 2 total grid steps.
    if batch * pl.cdiv(hw, tile) < 2 and tile > 128:
        tile = max(128, _round_up(pl.cdiv(hw, 2), 128))
    return tile


# ----------------------------------------------------------------------------
# full forward
# ----------------------------------------------------------------------------
def guided_attention_apply(params, x, pred_x, embedding):
    """x, pred_x: [B,3,H,W]; embedding: [B,depth,h,w] (NCHW, f32 or bf16)."""
    B, depth, h, w = embedding.shape
    hw = h * w

    residual_x = bilinear_resize_align_corners(
        jnp.abs(x.astype(jnp.float32) - pred_x.astype(jnp.float32)), (h, w))   # [B,3,h,w]
    res_map = gated_branch(residual_x, params["gate_w1"], params["gate_w2"])   # [B,1,h,w]

    # Native-dtype data path: bf16 stays bf16 (halves HBM traffic), everything else f32.
    compute_dtype = embedding.dtype if embedding.dtype == jnp.bfloat16 else jnp.float32
    elem_bytes = jnp.dtype(compute_dtype).itemsize

    # Fold eval-mode BatchNorm into the 1x1-conv weight and a per-channel bias column.
    eps = 1e-5
    scale = params["bn_gamma"] * lax.rsqrt(params["bn_var"] + eps)
    bias = params["bn_beta"] - params["bn_mean"] * scale
    w_bn = (params["h_w"].reshape(depth, depth) * scale[:, None]).astype(compute_dtype)
    bias_col = bias.reshape(depth, 1).astype(jnp.float32)

    # Pure reshape (no transpose): NCHW stays NCHW, pixels land on lanes.
    emb_flat = embedding.reshape(B, depth, hw).astype(compute_dtype)
    rmap_flat = res_map.reshape(B, 1, hw).astype(jnp.float32)

    budget = _vmem_budget_bytes()
    t_hw = _pick_hw_tile(hw, depth, elem_bytes, budget, B)
    n_hw = pl.cdiv(hw, t_hw)
    hw_pad = n_hw * t_hw
    if hw_pad != hw:                     # tail tile handled by zero-padding the pixel axis
        pad = ((0, 0), (0, 0), (0, hw_pad - hw))
        emb_flat = jnp.pad(emb_flat, pad)
        rmap_flat = jnp.pad(rmap_flat, pad)

    grid = (B, n_hw)
    # TODO(synk): for depth >= ~512 (v7x) / ~1024 (v5e/v6e) add a third "arbitrary"
    # K-split grid axis over depth with an f32 VMEM accumulator (pl.when init/finalize)
    # so the resident weight tile stays bounded; needs depth padded to a 128-multiple.

    cost = pl.CostEstimate(
        flops=2 * B * depth * depth * hw_pad + 3 * B * depth * hw_pad,
        bytes_accessed=(2 * B * depth * hw_pad * elem_bytes        # emb read + out write
                        + depth * depth * elem_bytes               # folded conv weight
                        + B * hw_pad * 4 + depth * 4),             # gate map + bias
        transcendentals=0)

    out_flat = pl.pallas_call(
        fused_attn_kernel,
        out_shape=jax.ShapeDtypeStruct((B, depth, hw_pad), compute_dtype),
        grid_spec=pltpu.PrefetchScalarGridSpec(
            num_scalar_prefetch=0,
            grid=grid,
            in_specs=[
                pl.BlockSpec((None, depth, t_hw), lambda b, j: (b, 0, j)),   # embedding tile
                pl.BlockSpec((depth, depth), lambda b, j: (0, 0),
                             pipeline_mode=pl.Buffered(1)),                  # invariant weight
                pl.BlockSpec((depth, 1), lambda b, j: (0, 0),
                             pipeline_mode=pl.Buffered(1)),                  # invariant bias
                pl.BlockSpec((None, 1, t_hw), lambda b, j: (b, 0, j)),       # res_map gate
            ],
            out_specs=pl.BlockSpec((None, depth, t_hw), lambda b, j: (b, 0, j)),
        ),
        compiler_params=pltpu.CompilerParams(
            dimension_semantics=("parallel", "parallel"),
            vmem_limit_bytes=int(budget)),
        cost_estimate=cost,
    )(emb_flat, w_bn, bias_col, rmap_flat)

    if hw_pad != hw:
        out_flat = out_flat[:, :, :hw]
    return out_flat.reshape(B, depth, h, w)   # already NCHW, no transpose needed


# ----------------------------------------------------------------------------
# deterministic parameter init (synthetic, matches PyTorch module shapes)
# ----------------------------------------------------------------------------
def init_params(key, depth):
    ks = jax.random.split(key, 7)
    return {
        "gate_w1": 0.2 * jax.random.normal(ks[0], (3, 3, 3, 3), jnp.float32),   # Conv2d(3,3,3)
        "gate_w2": 0.2 * jax.random.normal(ks[1], (1, 3, 1, 1), jnp.float32),   # Conv2d(3,1,1)
        "h_w":     0.05 * jax.random.normal(ks[2], (depth, depth, 1, 1), jnp.float32),  # Conv2d(d,d,1)
        "bn_gamma": 1.0 + 0.1 * jax.random.normal(ks[3], (depth,), jnp.float32),
        "bn_beta":  0.1 * jax.random.normal(ks[4], (depth,), jnp.float32),
        "bn_mean":  0.1 * jax.random.normal(ks[5], (depth,), jnp.float32),
        "bn_var":   jnp.abs(jax.random.normal(ks[6], (depth,), jnp.float32)) + 0.5,
    }


# ----------------------------------------------------------------------------
# pure-JAX reference of the full forward (for correctness check)
# ----------------------------------------------------------------------------
def reference_forward(params, x, pred_x, embedding):
    B, depth, h, w = embedding.shape
    residual_x = bilinear_resize_align_corners(jnp.abs(x - pred_x), (h, w))
    rpad = jnp.pad(residual_x, ((0, 0), (0, 0), (1, 1), (1, 1)))
    conv1 = lax.conv_general_dilated(
        rpad, params["gate_w1"], window_strides=(1, 1), padding="VALID",
        dimension_numbers=("NCHW", "OIHW", "NCHW"))
    conv2 = lax.conv_general_dilated(
        jnp.maximum(conv1, 0.0), params["gate_w2"], window_strides=(1, 1),
        padding="VALID", dimension_numbers=("NCHW", "OIHW", "NCHW"))
    res_map = jax.nn.sigmoid(conv2)                                   # [B,1,h,w]
    eps = 1e-5
    scale = params["bn_gamma"] / jnp.sqrt(params["bn_var"] + eps)
    bias = params["bn_beta"] - params["bn_mean"] * scale
    emb32 = embedding.astype(jnp.float32)
    hconv = jnp.einsum("bchw,oc->bohw", emb32, params["h_w"].reshape(depth, depth))
    hbn = jnp.maximum(hconv * scale[None, :, None, None] + bias[None, :, None, None], 0.0)
    return res_map * hbn + emb32


if __name__ == "__main__":
    key = jax.random.PRNGKey(0)
    kx, kp, ke, kparam = jax.random.split(key, 4)

    # small shapes: h*w = 256 keeps the fused kernel lane-dense with no padding
    B, depth, H, W, h, w = 2, 128, 32, 32, 16, 16
    x = jax.random.normal(kx, (B, 3, H, W), jnp.float32)
    pred_x = jax.random.normal(kp, (B, 3, H, W), jnp.float32)
    embedding = jax.random.normal(ke, (B, depth, h, w), jnp.float32)
    params = init_params(kparam, depth)

    fwd = jax.jit(guided_attention_apply)

    # f32 path (matches PyTorch eval-mode numerics)
    out = jax.block_until_ready(fwd(params, x, pred_x, embedding))
    ref = jax.block_until_ready(reference_forward(params, x, pred_x, embedding))
    np.testing.assert_allclose(np.asarray(out), np.asarray(ref), rtol=1e-4, atol=1e-4)

    # bf16 path (native production dtype: halves HBM traffic of the fused kernel)
    emb_bf16 = embedding.astype(jnp.bfloat16)
    out_bf16 = jax.block_until_ready(fwd(params, x, pred_x, emb_bf16))
    assert out_bf16.dtype == jnp.bfloat16
    ref_bf16 = jax.block_until_ready(reference_forward(params, x, pred_x, emb_bf16))
    np.testing.assert_allclose(np.asarray(out_bf16, dtype=np.float32), np.asarray(ref_bf16),
                               rtol=6e-2, atol=6e-2)

    print("KERNEL_OK")
</pallas_src>

<mosaic_0001>
module attributes {stable_mosaic.version = 11 : i64} {
  func.func @fused_attn_kernel(%arg0: i32, %arg1: i32, %arg2: memref<1x128x256xf32, #tpu.memory_space<vmem>>, %arg3: memref<128x128xf32, #tpu.memory_space<vmem>>, %arg4: memref<128x1xf32, #tpu.memory_space<vmem>>, %arg5: memref<1x1x256xf32, #tpu.memory_space<vmem>>, %arg6: memref<1x128x256xf32, #tpu.memory_space<vmem>>) attributes {dimension_semantics = [#tpu.dimension_semantics<parallel>, #tpu.dimension_semantics<parallel>], iteration_bounds = array<i64: 2, 1>, scalar_prefetch = 0 : i64, scratch_operands = 0 : i64, tpu.core_type = #tpu.core_type<tc>, window_params = [{transform_indices = @transform_0, window_bounds = array<i64: 1, 128, 256>}, {pipeline_mode = #tpu.pipeline_mode<synchronous>, transform_indices = @transform_1, window_bounds = array<i64: 128, 128>}, {pipeline_mode = #tpu.pipeline_mode<synchronous>, transform_indices = @transform_2, window_bounds = array<i64: 128, 1>}, {transform_indices = @transform_3, window_bounds = array<i64: 1, 1, 256>}, {transform_indices = @transform_4, window_bounds = array<i64: 1, 128, 256>}]} {
    %c0 = arith.constant 0 : index
    %c0_0 = arith.constant 0 : index
    %c0_1 = arith.constant 0 : index
    %0 = vector.load %arg2[%c0, %c0_0, %c0_1] : memref<1x128x256xf32, #tpu.memory_space<vmem>>, vector<1x128x256xf32>
    %1 = vector.shape_cast %0 : vector<1x128x256xf32> to vector<128x256xf32>
    %c0_2 = arith.constant 0 : index
    %c0_3 = arith.constant 0 : index
    %2 = vector.load %arg3[%c0_2, %c0_3] : memref<128x128xf32, #tpu.memory_space<vmem>>, vector<128x128xf32>
    %cst = arith.constant dense<0.000000e+00> : vector<128x256xf32>
    %3 = tpu.matmul %2, %1, %cst {dimension_numbers = #tpu.dot_dimension_numbers<[1], [0], [0], [1], [0, 0, 1, 1], [], []>} : vector<128x128xf32>, vector<128x256xf32>, vector<128x256xf32> -> vector<128x256xf32>
    %c0_4 = arith.constant 0 : index
    %c0_5 = arith.constant 0 : index
    %4 = vector.load %arg4[%c0_4, %c0_5] : memref<128x1xf32, #tpu.memory_space<vmem>>, vector<128x1xf32>
    %5 = vector.broadcast %4 : vector<128x1xf32> to vector<128x256xf32>
    %6 = arith.addf %3, %5 : vector<128x256xf32>
    %cst_6 = arith.constant 0.000000e+00 : f32
    %7 = vector.broadcast %cst_6 : f32 to vector<128x256xf32>
    %8 = arith.maximumf %6, %7 : vector<128x256xf32>
    %c0_7 = arith.constant 0 : index
    %c0_8 = arith.constant 0 : index
    %c0_9 = arith.constant 0 : index
    %9 = vector.load %arg5[%c0_7, %c0_8, %c0_9] : memref<1x1x256xf32, #tpu.memory_space<vmem>>, vector<1x1x256xf32>
    %10 = vector.shape_cast %9 : vector<1x1x256xf32> to vector<1x256xf32>
    %11 = vector.broadcast %10 : vector<1x256xf32> to vector<128x256xf32>
    %12 = arith.mulf %11, %8 : vector<128x256xf32>
    %13 = arith.addf %12, %1 : vector<128x256xf32>
    %c0_10 = arith.constant 0 : index
    %c0_11 = arith.constant 0 : index
    %c0_12 = arith.constant 0 : index
    %14 = vector.load %arg6[%c0_10, %c0_11, %c0_12] : memref<1x128x256xf32, #tpu.memory_space<vmem>>, vector<1x128x256xf32>
    %15 = vector.shape_cast %14 : vector<1x128x256xf32> to vector<128x256xf32>
    %16 = vector.shape_cast %13 : vector<128x256xf32> to vector<1x128x256xf32>
    tpu.vector_store %arg6[%c0_10, %c0_11, %c0_12], %16 {strides = array<i32>} : memref<1x128x256xf32, #tpu.memory_space<vmem>>, vector<1x128x256xf32>,
    return
  }
  func.func @transform_0(%arg0: i32, %arg1: i32) -> (i32, i32, i32) {
    %c0_i32 = arith.constant 0 : i32
    %c0_i32_0 = arith.constant 0 : i32
    return %arg0, %c0_i32, %arg1 : i32, i32, i32
  }
  func.func @transform_1(%arg0: i32, %arg1: i32) -> (i32, i32) {
    %c0_i32 = arith.constant 0 : i32
    %c0_i32_0 = arith.constant 0 : i32
    %c0_i32_1 = arith.constant 0 : i32
    return %c0_i32, %c0_i32_0 : i32, i32
  }
  func.func @transform_2(%arg0: i32, %arg1: i32) -> (i32, i32) {
    %c0_i32 = arith.constant 0 : i32
    %c0_i32_0 = arith.constant 0 : i32
    %c0_i32_1 = arith.constant 0 : i32
    return %c0_i32, %c0_i32_0 : i32, i32
  }
  func.func @transform_3(%arg0: i32, %arg1: i32) -> (i32, i32, i32) {
    %c0_i32 = arith.constant 0 : i32
    %c0_i32_0 = arith.constant 0 : i32
    return %arg0, %c0_i32, %arg1 : i32, i32, i32
  }
  func.func @transform_4(%arg0: i32, %arg1: i32) -> (i32, i32, i32) {
    %c0_i32 = arith.constant 0 : i32
    %c0_i32_0 = arith.constant 0 : i32
    return %arg0, %c0_i32, %arg1 : i32, i32, i32
  }
}

</mosaic_0001>

<llo_original>
// kernel: guided_attention_apply.1
$region0: #{guided_attention_apply.1}
  #allocation0 [shape = 'u32[]', space=smem, size = 0x4, offset = 0x4, fixed_abs, tag = 'smem constant byte address 0x4 - core index']
  #allocation1 [shape = 'u32[144,128]{1,0:T(1,128)}', space=vmem, size = 0x12000, scoped, tag = 'internal scratch']
  %s0 = inlined_call_operand.vmem [shape: f32[2,128,256], index: 0, kind: input, shape index: {}]
  %s1 = inlined_call_operand.vmem [shape: f32[128,128], index: 1, kind: input, shape index: {}]
  %s2 = inlined_call_operand.vmem [shape: f32[128,1], index: 2, kind: input, shape index: {}]
  %s3 = inlined_call_operand.vmem [shape: f32[2,1,256], index: 3, kind: input, shape index: {}]
  %s4 = inlined_call_operand.vmem [shape: f32[2,128,256], index: 4, kind: output, shape index: {}]
  %s5 = sld [smem:[#allocation0]]
  $region49: #{guided_attention_apply.1} parent=0
    _
  %s7 = ssub.s32 1, %s5
  %s8 = scalar_select 0, %s7, %s5
  loop: start=0, step=1, limit=4
  $region2: #{guided_attention_apply.1} parent=0 // loop_pre_header
    _
  $region3: #{guided_attention_apply.1} parent=0 // loop_header
    %s10 = sphi 0, %s14
    %p11 = scmp.ge.s32.totalorder %s10, 4
    %s17 = sphi 0, %s29
    %s18 = sphi 0, %s25
    %s19 = sphi 0, %s17
    %s20 = sphi 0, %s18
    %s21 = sphi 0, %s19
    %s22 = sphi 0, %s20
    %s34 = sphi 0, %s36
    %s37 = sphi 0, %s34
    %s38 = sphi 0, %s37
    %s54 = sphi 0, %s38
    %s58 = sphi 0, %s58
    %s60 = sphi 0, %s58
    %s61 = sphi 0, %s60
    %s75 = sphi 0, %s61
    %s79 = sphi 0, %s79
    %s81 = sphi 0, %s79
    %s82 = sphi 0, %s81
    %s96 = sphi 0, %s82
    %s104 = sphi 0, %s106
    %s107 = sphi 0, %s104
    %s108 = sphi 0, %s107
    %s124 = sphi 0, %s108
    %s132 = sphi 0, %s134
    %s135 = sphi 0, %s132
    %s136 = sphi 0, %s135
    %s152 = sphi 0, %s136
  $region4: #{guided_attention_apply.1} parent=0 // loop_header_branch
    %13 = sbr.rel (%p11) target = $region8
  $region5: #{guided_attention_apply.1} parent=0 // loop_body
    %s15 = ssub.s32 %s10, 1
    %s16 = ssub.s32 %s10, 2
    %s23 = sadd.s32 1, %s18
    %p24 = scmp.ge.s32.totalorder %s23, 1
    %s25 = scalar_select %p24, 0, %s23
    %s26 = sadd.s32 1, %s17
    %s27 = scalar_select %p24, %s26, %s17
    %p28 = scmp.ge.s32.totalorder %s27, 2
    %s29 = scalar_select %p28, 0, %s27
    %s30 = ssub.s32 %s17, %s29
    %s31 = ssub.s32 %s18, %s25
    %s32 = sor.u32 %s30, %s31
    %p33 = scmp.eq.s32.totalorder %s32, 0
    %s35 = sadd.s32 %s34, 1
    %s36 = scalar_select %p33, %s34, %s35
    %p39 = pneg %p33
    %p40 = scmp.eq.s32.totalorder %s10, 1
    %p41 = por %p39, %p40
    %p42 = scmp.ne.s32.totalorder %s34, %s37
    %p43 = scmp.eq.s32.totalorder %s10, 0
    %p44 = por %p42, %p43
    %p45 = scmp.ne.s32.totalorder %s34, %s37
    %p46 = scmp.eq.s32.totalorder %s15, 1
    %p47 = por %p45, %p46
    %p48 = scmp.ne.s32.totalorder %s37, %s38
    %p49 = scmp.eq.s32.totalorder %s15, 0
    %p50 = por %p48, %p49
    %p51 = scmp.ne.s32.totalorder %s37, %s38
    %p52 = scmp.eq.s32.totalorder %s16, 1
    %p53 = por %p51, %p52
    %p55 = scmp.ne.s32.totalorder %s38, %s54
    %p56 = scmp.eq.s32.totalorder %s16, 0
    %p57 = por %p55, %p56
    %s59 = sadd.s32 %s58, 1
    %p62 = scmp.eq.s32.totalorder %s10, 1
    %p63 = scmp.ne.s32.totalorder %s58, %s60
    %p64 = scmp.eq.s32.totalorder %s10, 0
    %p65 = por %p63, %p64
    %p66 = scmp.ne.s32.totalorder %s58, %s60
    %p67 = scmp.eq.s32.totalorder %s15, 1
    %p68 = por %p66, %p67
    %p69 = scmp.ne.s32.totalorder %s60, %s61
    %p70 = scmp.eq.s32.totalorder %s15, 0
    %p71 = por %p69, %p70
    %p72 = scmp.ne.s32.totalorder %s60, %s61
    %p73 = scmp.eq.s32.totalorder %s16, 1
    %p74 = por %p72, %p73
    %p76 = scmp.ne.s32.totalorder %s61, %s75
    %p77 = scmp.eq.s32.totalorder %s16, 0
    %p78 = por %p76, %p77
    %s80 = sadd.s32 %s79, 1
    %p83 = scmp.eq.s32.totalorder %s10, 1
    %p84 = scmp.ne.s32.totalorder %s79, %s81
    %p85 = scmp.eq.s32.totalorder %s10, 0
    %p86 = por %p84, %p85
    %p87 = scmp.ne.s32.totalorder %s79, %s81
    %p88 = scmp.eq.s32.totalorder %s15, 1
    %p89 = por %p87, %p88
    %p90 = scmp.ne.s32.totalorder %s81, %s82
    %p91 = scmp.eq.s32.totalorder %s15, 0
    %p92 = por %p90, %p91
    %p93 = scmp.ne.s32.totalorder %s81, %s82
    %p94 = scmp.eq.s32.totalorder %s16, 1
    %p95 = por %p93, %p94
    %p97 = scmp.ne.s32.totalorder %s82, %s96
    %p98 = scmp.eq.s32.totalorder %s16, 0
    %p99 = por %p97, %p98
    %s100 = ssub.s32 %s17, %s29
    %s101 = ssub.s32 %s18, %s25
    %s102 = sor.u32 %s100, %s101
    %p103 = scmp.eq.s32.totalorder %s102, 0
    %s105 = sadd.s32 %s104, 1
    %s106 = scalar_select %p103, %s104, %s105
    %p109 = pneg %p103
    %p110 = scmp.eq.s32.totalorder %s10, 1
    %p111 = por %p109, %p110
    %p112 = scmp.ne.s32.totalorder %s104, %s107
    %p113 = scmp.eq.s32.totalorder %s10, 0
    %p114 = por %p112, %p113
    %p115 = scmp.ne.s32.totalorder %s104, %s107
    %p116 = scmp.eq.s32.totalorder %s15, 1
    %p117 = por %p115, %p116
    %p118 = scmp.ne.s32.totalorder %s107, %s108
    %p119 = scmp.eq.s32.totalorder %s15, 0
    %p120 = por %p118, %p119
    %p121 = scmp.ne.s32.totalorder %s107, %s108
    %p122 = scmp.eq.s32.totalorder %s16, 1
    %p123 = por %p121, %p122
    %p125 = scmp.ne.s32.totalorder %s108, %s124
    %p126 = scmp.eq.s32.totalorder %s16, 0
    %p127 = por %p125, %p126
    %s128 = ssub.s32 %s17, %s29
    %s129 = ssub.s32 %s18, %s25
    %s130 = sor.u32 %s128, %s129
    %p131 = scmp.eq.s32.totalorder %s130, 0
    %s133 = sadd.s32 %s132, 1
    %s134 = scalar_select %p131, %s132, %s133
    %p137 = pneg %p131
    %p138 = scmp.eq.s32.totalorder %s10, 1
    %p139 = por %p137, %p138
    %p140 = scmp.ne.s32.totalorder %s132, %s135
    %p141 = scmp.eq.s32.totalorder %s10, 0
    %p142 = por %p140, %p141
    %p143 = scmp.ne.s32.totalorder %s132, %s135
    %p144 = scmp.eq.s32.totalorder %s15, 1
    %p145 = por %p143, %p144
    %p146 = scmp.ne.s32.totalorder %s135, %s136
    %p147 = scmp.eq.s32.totalorder %s15, 0
    %p148 = por %p146, %p147
    %p149 = scmp.ne.s32.totalorder %s135, %s136
    %p150 = scmp.eq.s32.totalorder %s16, 1
    %p151 = por %p149, %p150
    %p153 = scmp.ne.s32.totalorder %s136, %s152
    %p154 = scmp.eq.s32.totalorder %s16, 0
    %p155 = por %p153, %p154
    %p156 = scmp.le.s32.totalorder 1, %s10
    %p157 = scmp.lt.s32.totalorder %s10, 3
    %p158 = pnand %p156, %p157
    %p159 = pneg %p158
    // Predicated region
    $region9: #{guided_attention_apply.1} parent=5 // pred_check
      _
    $region10: #{guided_attention_apply.1} parent=5 // pred_check_branch
      %161 = sbr.rel (%p158) target = $region12
    $region11: #{guided_attention_apply.1} parent=5 // pred_region
      %s162 = ssub.s32 %s10, 1
      // Predicated region
      $region13: #{guided_attention_apply.1} parent=11 // pred_check
        %p163 = pneg %p71
      $region14: #{guided_attention_apply.1} parent=11 // pred_check_branch
        %165 = sbr.rel (%p163) target = $region16
      $region15: #{guided_attention_apply.1} parent=11 // pred_region
        _
      $region16: #{guided_attention_apply.1} parent=11 // pred_fallthru
        _
      // Predicated region
      $region17: #{guided_attention_apply.1} parent=11 // pred_check
        %p166 = pneg %p92
      $region18: #{guided_attention_apply.1} parent=11 // pred_check_branch
        %168 = sbr.rel (%p166) target = $region20
      $region19: #{guided_attention_apply.1} parent=11 // pred_region
        _
      $region20: #{guided_attention_apply.1} parent=11 // pred_fallthru
        _
    $region12: #{guided_attention_apply.1} parent=5 // pred_fallthru
      _
    %p169 = scmp.lt.s32.totalorder %s10, 2
    // Predicated region
    $region21: #{guided_attention_apply.1} parent=5 // pred_check
      %p170 = pneg %p169
    $region22: #{guided_attention_apply.1} parent=5 // pred_check_branch
      %172 = sbr.rel (%p170) target = $region24
    $region23: #{guided_attention_apply.1} parent=5 // pred_region
      // Predicated region
      $region25: #{guided_attention_apply.1} parent=23 // pred_check
        %p173 = pneg %p44
      $region26: #{guided_attention_apply.1} parent=23 // pred_check_branch
        %175 = sbr.rel (%p173) target = $region28
      $region27: #{guided_attention_apply.1} parent=23 // pred_region
        %s176 = smul.u32 2, %s18
        %p177 = scmp.lt.s32.totalorder %s17, 1
        %s178 = scalar_select %p177, %s17, 1
        %p179 = scmp.lt.s32.totalorder %s176, 1
        %s180 = scalar_select %p179, %s176, 1
        %s181 = smul.addr %s178, 32
        %s182 = sadd.s32 %s180, %s181
        %s183 = smul.addr %s182, 8
        %s184 = scalar_lea.vmem %s0, %s183
        %s185 = smul.u32 2, %s18
      $region28: #{guided_attention_apply.1} parent=23 // pred_fallthru
        _
      // Predicated region
      $region29: #{guided_attention_apply.1} parent=23 // pred_check
        %p186 = pneg %p114
      $region30: #{guided_attention_apply.1} parent=23 // pred_check_branch
        %188 = sbr.rel (%p186) target = $region32
      $region31: #{guided_attention_apply.1} parent=23 // pred_region
        %s189 = smul.u32 2, %s18
        %p190 = scmp.lt.s32.totalorder %s17, 1
        %s191 = scalar_select %p190, %s17, 1
        %p192 = scmp.lt.s32.totalorder %s189, 1
        %s193 = scalar_select %p192, %s189, 1
        %s194 = smul.addr %s191, 2
        %s195 = sadd.s32 %s193, %s194
        %s196 = scalar_lea.vmem %s3, %s195
        %s197 = smul.u32 2, %s18
      $region32: #{guided_attention_apply.1} parent=23 // pred_fallthru
        _
    $region24: #{guided_attention_apply.1} parent=5 // pred_fallthru
      _
    %p198 = scmp.le.s32.totalorder 1, %s10
    %p199 = scmp.lt.s32.totalorder %s10, 3
    %p200 = pnand %p198, %p199
    %p201 = pneg %p200
    // Predicated region
    $region33: #{guided_attention_apply.1} parent=5 // pred_check
      _
    $region34: #{guided_attention_apply.1} parent=5 // pred_check_branch
      %203 = sbr.rel (%p200) target = $region36
    $region35: #{guided_attention_apply.1} parent=5 // pred_region
      %s204 = ssub.s32 %s10, 1
      %s205 = smul.u32 2, %s20
      %p206 = scmp.lt.s32.totalorder %s19, 1
      %s207 = scalar_select %p206, %s19, 1
      %p208 = scmp.lt.s32.totalorder %s205, 1
      %s209 = scalar_select %p208, %s205, 1
      %s210 = smul.addr %s207, 32
      %s211 = sadd.s32 %s209, %s210
      %s212 = smul.addr %s211, 8
      %s213 = scalar_lea.vmem %s0, %s212
      %p214 = pneg %p50
      %p215 = pneg %p47
      %p216 = pneg %p71
      %p217 = pneg %p68
      %p218 = pneg %p92
      %p219 = pneg %p89
      %s220 = smul.u32 2, %s20
      %p221 = scmp.lt.s32.totalorder %s19, 1
      %s222 = scalar_select %p221, %s19, 1
      %p223 = scmp.lt.s32.totalorder %s220, 1
      %s224 = scalar_select %p223, %s220, 1
      %s225 = smul.addr %s222, 2
      %s226 = sadd.s32 %s224, %s225
      %s227 = scalar_lea.vmem %s3, %s226
      %p228 = pneg %p120
      %p229 = pneg %p117
      %p230 = pneg %p148
      %p231 = pneg %p145
      %s232 = smul.u32 2, %s20
      %p233 = scmp.lt.s32.totalorder %s19, 1
      %s234 = scalar_select %p233, %s19, 1
      %p235 = scmp.lt.s32.totalorder %s232, 1
      %s236 = scalar_select %p235, %s232, 1
      %s237 = smul.addr %s234, 32
      %s238 = sadd.s32 %s236, %s237
      %s239 = smul.addr %s238, 8
      %s240 = scalar_lea.vmem %s4, %s239
      %s241 = smul.u32 2, %s20
      %p242 = scmp.lt.s32.totalorder %s19, 1
      %s243 = scalar_select %p242, %s19, 1
      %p244 = scmp.lt.s32.totalorder %s241, 1
      %s245 = scalar_select %p244, %s241, 1
      %s246 = smul.addr %s243, 32
      %s247 = sadd.s32 %s245, %s246
      %s248 = smul.addr %s247, 8
      %s249 = scalar_lea.vmem %s0, %s248
      %s250 = smul.u32 2, %s20
      %s251 = smul.u32 2, %s20
      %p252 = scmp.lt.s32.totalorder %s19, 1
      %s253 = scalar_select %p252, %s19, 1
      %p254 = scmp.lt.s32.totalorder %s251, 1
      %s255 = scalar_select %p254, %s251, 1
      %s256 = smul.addr %s253, 2
      %s257 = sadd.s32 %s255, %s256
      %s258 = scalar_lea.vmem %s3, %s257
      %s259 = smul.u32 2, %s20
      %s260 = smul.u32 2, %s20
      %p261 = scmp.lt.s32.totalorder %s19, 1
      %s262 = scalar_select %p261, %s19, 1
      %p263 = scmp.lt.s32.totalorder %s260, 1
      %s264 = scalar_select %p263, %s260, 1
      %s265 = smul.addr %s262, 32
      %s266 = sadd.s32 %s264, %s265
      %s267 = smul.addr %s266, 8
      %s268 = scalar_lea.vmem %s4, %s267
      %s269 = smul.u32 2, %s20
      %v270 = vld [vmem:[%s249] sm:$0xff]
      %v271 = vld [vmem:[%s249 + $0x8] sm:$0xff]
      %v272 = vld [vmem:[%s249 + $0x10] sm:$0xff]
      %v273 = vld [vmem:[%s249 + $0x18] sm:$0xff]
      %v274 = vld [vmem:[%s249 + $0x20] sm:$0xff]
      %v275 = vld [vmem:[%s249 + $0x28] sm:$0xff]
      %v276 = vld [vmem:[%s249 + $0x30] sm:$0xff]
      %v277 = vld [vmem:[%s249 + $0x38] sm:$0xff]
      %v278 = vld [vmem:[%s249 + $0x40] sm:$0xff]
      %v279 = vld [vmem:[%s249 + $0x48] sm:$0xff]
      %v280 = vld [vmem:[%s249 + $0x50] sm:$0xff]
      %v281 = vld [vmem:[%s249 + $0x58] sm:$0xff]
      %v282 = vld [vmem:[%s249 + $0x60] sm:$0xff]
      %v283 = vld [vmem:[%s249 + $0x68] sm:$0xff]
      %v284 = vld [vmem:[%s249 + $0x70] sm:$0xff]
      %v285 = vld [vmem:[%s249 + $0x78] sm:$0xff]
      %v286 = vld [vmem:[%s249 + $0x80] sm:$0xff]
      %v287 = vld [vmem:[%s249 + $0x88] sm:$0xff]
      %v288 = vld [vmem:[%s249 + $0x90] sm:$0xff]
      %v289 = vld [vmem:[%s249 + $0x98] sm:$0xff]
      %v290 = vld [vmem:[%s249 + $0xa0] sm:$0xff]
      %v291 = vld [vmem:[%s249 + $0xa8] sm:$0xff]
      %v292 = vld [vmem:[%s249 + $0xb0] sm:$0xff]
      %v293 = vld [vmem:[%s249 + $0xb8] sm:$0xff]
      %v294 = vld [vmem:[%s249 + $0xc0] sm:$0xff]
      %v295 = vld [vmem:[%s249 + $0xc8] sm:$0xff]
      %v296 = vld [vmem:[%s249 + $0xd0] sm:$0xff]
      %v297 = vld [vmem:[%s249 + $0xd8] sm:$0xff]
      %v298 = vld [vmem:[%s249 + $0xe0] sm:$0xff]
      %v299 = vld [vmem:[%s249 + $0xe8] sm:$0xff]
      %v300 = vld [vmem:[%s249 + $0xf0] sm:$0xff]
      %v301 = vld [vmem:[%s249 + $0xf8] sm:$0xff]
      %v302 = vld [vmem:[%s1] sm:$0xff]
      %v303 = vld [vmem:[%s1 + $0x8] sm:$0xff]
      %v304 = vld [vmem:[%s1 + $0x10] sm:$0xff]
      %v305 = vld [vmem:[%s1 + $0x18] sm:$0xff]
      %v306 = vld [vmem:[%s1 + $0x20] sm:$0xff]
      %v307 = vld [vmem:[%s1 + $0x28] sm:$0xff]
      %v308 = vld [vmem:[%s1 + $0x30] sm:$0xff]
      %v309 = vld [vmem:[%s1 + $0x38] sm:$0xff]
      %v310 = vld [vmem:[%s1 + $0x40] sm:$0xff]
      %v311 = vld [vmem:[%s1 + $0x48] sm:$0xff]
      %v312 = vld [vmem:[%s1 + $0x50] sm:$0xff]
      %v313 = vld [vmem:[%s1 + $0x58] sm:$0xff]
      %v314 = vld [vmem:[%s1 + $0x60] sm:$0xff]
      %v315 = vld [vmem:[%s1 + $0x68] sm:$0xff]
      %v316 = vld [vmem:[%s1 + $0x70] sm:$0xff]
      %v317 = vld [vmem:[%s1 + $0x78] sm:$0xff]
      %v318 = vld [vmem:[%s2] sm:$0xff]
      %v319 = vld [vmem:[%s2 + $0x8] sm:$0xff]
      %v320 = vld [vmem:[%s2 + $0x10] sm:$0xff]
      %v321 = vld [vmem:[%s2 + $0x18] sm:$0xff]
      %v322 = vld [vmem:[%s2 + $0x20] sm:$0xff]
      %v323 = vld [vmem:[%s2 + $0x28] sm:$0xff]
      %v324 = vld [vmem:[%s2 + $0x30] sm:$0xff]
      %v325 = vld [vmem:[%s2 + $0x38] sm:$0xff]
      %v326 = vld [vmem:[%s2 + $0x40] sm:$0xff]
      %v327 = vld [vmem:[%s2 + $0x48] sm:$0xff]
      %v328 = vld [vmem:[%s2 + $0x50] sm:$0xff]
      %v329 = vld [vmem:[%s2 + $0x58] sm:$0xff]
      %v330 = vld [vmem:[%s2 + $0x60] sm:$0xff]
      %v331 = vld [vmem:[%s2 + $0x68] sm:$0xff]
      %v332 = vld [vmem:[%s2 + $0x70] sm:$0xff]
      %v333 = vld [vmem:[%s2 + $0x78] sm:$0xff]
      %335 = vset.pattern.permute.xlu0 0
      %336 = vperm.xlu0 %335, %v318
      %v337 = vpop.permute.xlu0 %336
      %340 = vset.pattern.permute.xlu0 0
      %341 = vperm.xlu0 %340, %v319
      %v342 = vpop.permute.xlu0 %341
      %345 = vset.pattern.permute.xlu0 0
      %346 = vperm.xlu0 %345, %v320
      %v347 = vpop.permute.xlu0 %346
      %350 = vset.pattern.permute.xlu0 0
      %351 = vperm.xlu0 %350, %v321
      %v352 = vpop.permute.xlu0 %351
      %355 = vset.pattern.permute.xlu0 0
      %356 = vperm.xlu0 %355, %v322
      %v357 = vpop.permute.xlu0 %356
      %360 = vset.pattern.permute.xlu0 0
      %361 = vperm.xlu0 %360, %v323
      %v362 = vpop.permute.xlu0 %361
      %365 = vset.pattern.permute.xlu0 0
      %366 = vperm.xlu0 %365, %v324
      %v367 = vpop.permute.xlu0 %366
      %370 = vset.pattern.permute.xlu0 0
      %371 = vperm.xlu0 %370, %v325
      %v372 = vpop.permute.xlu0 %371
      %375 = vset.pattern.permute.xlu0 0
      %376 = vperm.xlu0 %375, %v326
      %v377 = vpop.permute.xlu0 %376
      %380 = vset.pattern.permute.xlu0 0
      %381 = vperm.xlu0 %380, %v327
      %v382 = vpop.permute.xlu0 %381
      %385 = vset.pattern.permute.xlu0 0
      %386 = vperm.xlu0 %385, %v328
      %v387 = vpop.permute.xlu0 %386
      %390 = vset.pattern.permute.xlu0 0
      %391 = vperm.xlu0 %390, %v329
      %v392 = vpop.permute.xlu0 %391
      %395 = vset.pattern.permute.xlu0 0
      %396 = vperm.xlu0 %395, %v330
      %v397 = vpop.permute.xlu0 %396
      %400 = vset.pattern.permute.xlu0 0
      %401 = vperm.xlu0 %400, %v331
      %v402 = vpop.permute.xlu0 %401
      %405 = vset.pattern.permute.xlu0 0
      %406 = vperm.xlu0 %405, %v332
      %v407 = vpop.permute.xlu0 %406
      %410 = vset.pattern.permute.xlu0 0
      %411 = vperm.xlu0 %410, %v333
      %v412 = vpop.permute.xlu0 %411
      %414 = vmatprep.subr.mxu0 %v271
      %415 = vmatpush1.msra.mxu0 %v270
      %416 = vmatprep.subr.mxu0 %v273
      %417 = vmatpush1.msra.mxu0 %v272
      %418 = vmatprep.subr.mxu0 %v275
      %419 = vmatpush1.msra.mxu0 %v274
      %420 = vmatprep.subr.mxu0 %v277
      %421 = vmatpush1.msra.mxu0 %v276
      %422 = vmatprep.subr.mxu0 %v279
      %423 = vmatpush1.msra.mxu0 %v278
      %424 = vmatprep.subr.mxu0 %v281
      %425 = vmatpush1.msra.mxu0 %v280
      %426 = vmatprep.subr.mxu0 %v283
      %427 = vmatpush1.msra.mxu0 %v282
      %428 = vmatprep.subr.mxu0 %v285
      %429 = vmatpush1.msra.mxu0 %v284
      %430 = vmatprep.subr.mxu0 %v287
      %431 = vmatpush1.msra.mxu0 %v286
      %432 = vmatprep.subr.mxu0 %v289
      %433 = vmatpush1.msra.mxu0 %v288
      %434 = vmatprep.subr.mxu0 %v291
      %435 = vmatpush1.msra.mxu0 %v290
      %436 = vmatprep.subr.mxu0 %v293
      %437 = vmatpush1.msra.mxu0 %v292
      %438 = vmatprep.subr.mxu0 %v295
      %439 = vmatpush1.msra.mxu0 %v294
      %440 = vmatprep.subr.mxu0 %v297
      %441 = vmatpush1.msra.mxu0 %v296
      %442 = vmatprep.subr.mxu0 %v299
      %443 = vmatpush1.msra.mxu0 %v298
      %444 = vmatprep.subr.mxu0 %v301
      %445 = vmatpush1.msra.mxu0 %v300
      %446 = vmatprep.subr.mxu0 0.0
      %447 = vmatpush1.msra.mxu0 0.0
      %448 = vmatprep.subr.mxu0 0.0
      %449 = vmatpush1.msra.mxu0 0.0
      %450 = vmatprep.subr.mxu0 0.0
      %451 = vmatpush1.msra.mxu0 0.0
      %452 = vmatprep.subr.mxu0 0.0
      %453 = vmatpush1.msra.mxu0 0.0
      %454 = vmatprep.subr.mxu0 0.0
      %455 = vmatpush1.msra.mxu0 0.0
      %456 = vmatprep.subr.mxu0 0.0
      %457 = vmatpush1.msra.mxu0 0.0
      %458 = vmatprep.subr.mxu0 0.0
      %459 = vmatpush1.msra.mxu0 0.0
      %460 = vmatprep.subr.mxu0 0.0
      %461 = vmatpush1.msra.mxu0 0.0
      %462 = vmatprep.subr.mxu0 0.0
      %463 = vmatpush1.msra.mxu0 0.0
      %464 = vmatprep.subr.mxu0 0.0
      %465 = vmatpush1.msra.mxu0 0.0
      %466 = vmatprep.subr.mxu0 0.0
      %467 = vmatpush1.msra.mxu0 0.0
      %468 = vmatprep.subr.mxu0 0.0
      %469 = vmatpush1.msra.mxu0 0.0
      %470 = vmatprep.subr.mxu0 0.0
      %471 = vmatpush1.msra.mxu0 0.0
      %472 = vmatprep.subr.mxu0 0.0
      %473 = vmatpush1.msra.mxu0 0.0
      %474 = vmatprep.subr.mxu0 0.0
      %475 = vmatpush1.msra.mxu0 0.0
      %476 = vmatprep.subr.mxu0 0.0
      %477 = vmatpush1.msra.mxu0 0.0
      %478 = vmatprep.mubr.f32.mxu0 0.0
      %479 = vmatmul.mubr.f32.gmra.mrb[0].mxu0 %v302
      %v480 = vpop.f32.mrb[0].mxu0
      %v481 = vadd.f32 %v337, %v480
      %v482 = vpop.f32.mrb[0].mxu0
      %v483 = vadd.f32 %v337, %v482
      %484 = vmatprep.mubr.f32.mxu0 0.0
      %485 = vmatmul.mubr.f32.gmra.mrb[0].mxu0 %v303
      %v486 = vpop.f32.mrb[0].mxu0
      %v487 = vadd.f32 %v342, %v486
      %v488 = vpop.f32.mrb[0].mxu0
      %v489 = vadd.f32 %v342, %v488
      %490 = vmatprep.mubr.f32.mxu0 0.0
      %491 = vmatmul.mubr.f32.gmra.mrb[0].mxu0 %v304
      %v492 = vpop.f32.mrb[0].mxu0
      %v493 = vadd.f32 %v347, %v492
      %v494 = vpop.f32.mrb[0].mxu0
      %v495 = vadd.f32 %v347, %v494
      %496 = vmatprep.mubr.f32.mxu0 0.0
      %497 = vmatmul.mubr.f32.gmra.mrb[0].mxu0 %v305
      %v498 = vpop.f32.mrb[0].mxu0
      %v499 = vadd.f32 %v352, %v498
      %v500 = vpop.f32.mrb[0].mxu0
      %v501 = vadd.f32 %v352, %v500
      %502 = vmatprep.mubr.f32.mxu0 0.0
      %503 = vmatmul.mubr.f32.gmra.mrb[0].mxu0 %v306
      %v504 = vpop.f32.mrb[0].mxu0
      %v505 = vadd.f32 %v357, %v504
      %v506 = vpop.f32.mrb[0].mxu0
      %v507 = vadd.f32 %v357, %v506
      %508 = vmatprep.mubr.f32.mxu0 0.0
      %509 = vmatmul.mubr.f32.gmra.mrb[0].mxu0 %v307
      %v510 = vpop.f32.mrb[0].mxu0
      %v511 = vadd.f32 %v362, %v510
      %v512 = vpop.f32.mrb[0].mxu0
      %v513 = vadd.f32 %v362, %v512
      %514 = vmatprep.mubr.f32.mxu0 0.0
      %515 = vmatmul.mubr.f32.gmra.mrb[0].mxu0 %v308
      %v516 = vpop.f32.mrb[0].mxu0
      %v517 = vadd.f32 %v367, %v516
      %v518 = vpop.f32.mrb[0].mxu0
      %v519 = vadd.f32 %v367, %v518
      %520 = vmatprep.mubr.f32.mxu0 0.0
      %521 = vmatmul.mubr.f32.gmra.mrb[0].mxu0 %v309
      %v522 = vpop.f32.mrb[0].mxu0
      %v523 = vadd.f32 %v372, %v522
      %v524 = vpop.f32.mrb[0].mxu0
      %v525 = vadd.f32 %v372, %v524
      %526 = vmatprep.mubr.f32.mxu0 0.0
      %527 = vmatmul.mubr.f32.gmra.mrb[0].mxu0 %v310
      %v528 = vpop.f32.mrb[0].mxu0
      %v529 = vadd.f32 %v377, %v528
      %v530 = vpop.f32.mrb[0].mxu0
      %v531 = vadd.f32 %v377, %v530
      %532 = vmatprep.mubr.f32.mxu0 0.0
      %533 = vmatmul.mubr.f32.gmra.mrb[0].mxu0 %v311
      %v534 = vpop.f32.mrb[0].mxu0
      %v535 = vadd.f32 %v382, %v534
      %v536 = vpop.f32.mrb[0].mxu0
      %v537 = vadd.f32 %v382, %v536
      %538 = vmatprep.mubr.f32.mxu0 0.0
      %539 = vmatmul.mubr.f32.gmra.mrb[0].mxu0 %v312
      %v540 = vpop.f32.mrb[0].mxu0
      %v541 = vadd.f32 %v387, %v540
      %v542 = vpop.f32.mrb[0].mxu0
      %v543 = vadd.f32 %v387, %v542
      %544 = vmatprep.mubr.f32.mxu0 0.0
      %545 = vmatmul.mubr.f32.gmra.mrb[0].mxu0 %v313
      %v546 = vpop.f32.mrb[0].mxu0
      %v547 = vadd.f32 %v392, %v546
      %v548 = vpop.f32.mrb[0].mxu0
      %v549 = vadd.f32 %v392, %v548
      %550 = vmatprep.mubr.f32.mxu0 0.0
      %551 = vmatmul.mubr.f32.gmra.mrb[0].mxu0 %v314
      %v552 = vpop.f32.mrb[0].mxu0
      %v553 = vadd.f32 %v397, %v552
      %v554 = vpop.f32.mrb[0].mxu0
      %v555 = vadd.f32 %v397, %v554
      %556 = vmatprep.mubr.f32.mxu0 0.0
      %557 = vmatmul.mubr.f32.gmra.mrb[0].mxu0 %v315
      %v558 = vpop.f32.mrb[0].mxu0
      %v559 = vadd.f32 %v402, %v558
      %v560 = vpop.f32.mrb[0].mxu0
      %v561 = vadd.f32 %v402, %v560
      %562 = vmatprep.mubr.f32.mxu0 0.0
      %563 = vmatmul.mubr.f32.gmra.mrb[0].mxu0 %v316
      %v564 = vpop.f32.mrb[0].mxu0
      %v565 = vadd.f32 %v407, %v564
      %v566 = vpop.f32.mrb[0].mxu0
      %v567 = vadd.f32 %v407, %v566
      %568 = vmatprep.mubr.f32.mxu0 0.0
      %569 = vmatmul.mubr.f32.gmra.mrb[0].mxu0 %v317
      %v570 = vpop.f32.mrb[0].mxu0
      %v571 = vadd.f32 %v412, %v570
      %v572 = vpop.f32.mrb[0].mxu0
      %v573 = vadd.f32 %v412, %v572
      %574 = vdwg.mxu0
      %v575 = vmax.f32 %v481, 0.0
      %v576 = vmax.f32 %v483, 0.0
      %v577 = vmax.f32 %v487, 0.0
      %v578 = vmax.f32 %v489, 0.0
      %v579 = vmax.f32 %v493, 0.0
      %v580 = vmax.f32 %v495, 0.0
      %v581 = vmax.f32 %v499, 0.0
      %v582 = vmax.f32 %v501, 0.0
      %v583 = vmax.f32 %v505, 0.0
      %v584 = vmax.f32 %v507, 0.0
      %v585 = vmax.f32 %v511, 0.0
      %v586 = vmax.f32 %v513, 0.0
      %v587 = vmax.f32 %v517, 0.0
      %v588 = vmax.f32 %v519, 0.0
      %v589 = vmax.f32 %v523, 0.0
      %v590 = vmax.f32 %v525, 0.0
      %v591 = vmax.f32 %v529, 0.0
      %v592 = vmax.f32 %v531, 0.0
      %v593 = vmax.f32 %v535, 0.0
      %v594 = vmax.f32 %v537, 0.0
      %v595 = vmax.f32 %v541, 0.0
      %v596 = vmax.f32 %v543, 0.0
      %v597 = vmax.f32 %v547, 0.0
      %v598 = vmax.f32 %v549, 0.0
      %v599 = vmax.f32 %v553, 0.0
      %v600 = vmax.f32 %v555, 0.0
      %v601 = vmax.f32 %v559, 0.0
      %v602 = vmax.f32 %v561, 0.0
      %v603 = vmax.f32 %v565, 0.0
      %v604 = vmax.f32 %v567, 0.0
      %v605 = vmax.f32 %v571, 0.0
      %v606 = vmax.f32 %v573, 0.0
      %v607 = vld [vmem:[%s258] sm:$0x3]
      %v609 = vlaneseq
      %v610 = vshrl.u32 %v609, 7
      %v611 = vsub.s32 0, %v610
      %v612 = vrot.slane %v607, %v611
      %v613 = vlaneseq
      %v614 = vshrl.u32 %v613, 7
      %v615 = vsub.s32 1, %v614
      %v616 = vrot.slane %v607, %v615
      %v619 = vmul.f32 %v612, %v575
      %v620 = vmul.f32 %v616, %v576
      %v621 = vmul.f32 %v612, %v577
      %v622 = vmul.f32 %v616, %v578
      %v623 = vmul.f32 %v612, %v579
      %v624 = vmul.f32 %v616, %v580
      %v625 = vmul.f32 %v612, %v581
      %v626 = vmul.f32 %v616, %v582
      %v627 = vmul.f32 %v612, %v583
      %v628 = vmul.f32 %v616, %v584
      %v629 = vmul.f32 %v612, %v585
      %v630 = vmul.f32 %v616, %v586
      %v631 = vmul.f32 %v612, %v587
      %v632 = vmul.f32 %v616, %v588
      %v633 = vmul.f32 %v612, %v589
      %v634 = vmul.f32 %v616, %v590
      %v635 = vmul.f32 %v612, %v591
      %v636 = vmul.f32 %v616, %v592
      %v637 = vmul.f32 %v612, %v593
      %v638 = vmul.f32 %v616, %v594
      %v639 = vmul.f32 %v612, %v595
      %v640 = vmul.f32 %v616, %v596
      %v641 = vmul.f32 %v612, %v597
      %v642 = vmul.f32 %v616, %v598
      %v643 = vmul.f32 %v612, %v599
      %v644 = vmul.f32 %v616, %v600
      %v645 = vmul.f32 %v612, %v601
      %v646 = vmul.f32 %v616, %v602
      %v647 = vmul.f32 %v612, %v603
      %v648 = vmul.f32 %v616, %v604
      %v649 = vmul.f32 %v612, %v605
      %v650 = vmul.f32 %v616, %v606
      %v651 = vadd.f32 %v619, %v270
      %v652 = vadd.f32 %v620, %v271
      %v653 = vadd.f32 %v621, %v272
      %v654 = vadd.f32 %v622, %v273
      %v655 = vadd.f32 %v623, %v274
      %v656 = vadd.f32 %v624, %v275
      %v657 = vadd.f32 %v625, %v276
      %v658 = vadd.f32 %v626, %v277
      %v659 = vadd.f32 %v627, %v278
      %v660 = vadd.f32 %v628, %v279
      %v661 = vadd.f32 %v629, %v280
      %v662 = vadd.f32 %v630, %v281
      %v663 = vadd.f32 %v631, %v282
      %v664 = vadd.f32 %v632, %v283
      %v665 = vadd.f32 %v633, %v284
      %v666 = vadd.f32 %v634, %v285
      %v667 = vadd.f32 %v635, %v286
      %v668 = vadd.f32 %v636, %v287
      %v669 = vadd.f32 %v637, %v288
      %v670 = vadd.f32 %v638, %v289
      %v671 = vadd.f32 %v639, %v290
      %v672 = vadd.f32 %v640, %v291
      %v673 = vadd.f32 %v641, %v292
      %v674 = vadd.f32 %v642, %v293
      %v675 = vadd.f32 %v643, %v294
      %v676 = vadd.f32 %v644, %v295
      %v677 = vadd.f32 %v645, %v296
      %v678 = vadd.f32 %v646, %v297
      %v679 = vadd.f32 %v647, %v298
      %v680 = vadd.f32 %v648, %v299
      %v681 = vadd.f32 %v649, %v300
      %v682 = vadd.f32 %v650, %v301
      %683 = vst [vmem:[%s268] sm:$0xff] %v651
      %684 = vst [vmem:[%s268 + $0x8] sm:$0xff] %v652
      %685 = vst [vmem:[%s268 + $0x10] sm:$0xff] %v653
      %686 = vst [vmem:[%s268 + $0x18] sm:$0xff] %v654
      %687 = vst [vmem:[%s268 + $0x20] sm:$0xff] %v655
      %688 = vst [vmem:[%s268 + $0x28] sm:$0xff] %v656
      %689 = vst [vmem:[%s268 + $0x30] sm:$0xff] %v657
      %690 = vst [vmem:[%s268 + $0x38] sm:$0xff] %v658
      %691 = vst [vmem:[%s268 + $0x40] sm:$0xff] %v659
      %692 = vst [vmem:[%s268 + $0x48] sm:$0xff] %v660
      %693 = vst [vmem:[%s268 + $0x50] sm:$0xff] %v661
      %694 = vst [vmem:[%s268 + $0x58] sm:$0xff] %v662
      %695 = vst [vmem:[%s268 + $0x60] sm:$0xff] %v663
      %696 = vst [vmem:[%s268 + $0x68] sm:$0xff] %v664
      %697 = vst [vmem:[%s268 + $0x70] sm:$0xff] %v665
      %698 = vst [vmem:[%s268 + $0x78] sm:$0xff] %v666
      %699 = vst [vmem:[%s268 + $0x80] sm:$0xff] %v667
      %700 = vst [vmem:[%s268 + $0x88] sm:$0xff] %v668
      %701 = vst [vmem:[%s268 + $0x90] sm:$0xff] %v669
      %702 = vst [vmem:[%s268 + $0x98] sm:$0xff] %v670
      %703 = vst [vmem:[%s268 + $0xa0] sm:$0xff] %v671
      %704 = vst [vmem:[%s268 + $0xa8] sm:$0xff] %v672
      %705 = vst [vmem:[%s268 + $0xb0] sm:$0xff] %v673
      %706 = vst [vmem:[%s268 + $0xb8] sm:$0xff] %v674
      %707 = vst [vmem:[%s268 + $0xc0] sm:$0xff] %v675
      %708 = vst [vmem:[%s268 + $0xc8] sm:$0xff] %v676
      %709 = vst [vmem:[%s268 + $0xd0] sm:$0xff] %v677
      %710 = vst [vmem:[%s268 + $0xd8] sm:$0xff] %v678
      %711 = vst [vmem:[%s268 + $0xe0] sm:$0xff] %v679
      %712 = vst [vmem:[%s268 + $0xe8] sm:$0xff] %v680
      %713 = vst [vmem:[%s268 + $0xf0] sm:$0xff] %v681
      %714 = vst [vmem:[%s268 + $0xf8] sm:$0xff] %v682
      %s715 = smul.u32 2, %s20
      %p716 = scmp.lt.s32.totalorder %s19, 1
      %s717 = scalar_select %p716, %s19, 1
      %p718 = scmp.lt.s32.totalorder %s715, 1
      %s719 = scalar_select %p718, %s715, 1
      %s720 = smul.addr %s717, 32
      %s721 = sadd.s32 %s719, %s720
      %s722 = smul.addr %s721, 8
      %s723 = scalar_lea.vmem %s4, %s722
      // Predicated region
      $region37: #{guided_attention_apply.1} parent=35 // pred_check
        %p724 = pneg %p145
      $region38: #{guided_attention_apply.1} parent=35 // pred_check_branch
        %726 = sbr.rel (%p724) target = $region40
      $region39: #{guided_attention_apply.1} parent=35 // pred_region
        %s727 = smul.u32 2, %s20
      $region40: #{guided_attention_apply.1} parent=35 // pred_fallthru
        _
    $region36: #{guided_attention_apply.1} parent=5 // pred_fallthru
      _
    %p728 = scmp.le.s32.totalorder 2, %s10
    // Predicated region
    $region41: #{guided_attention_apply.1} parent=5 // pred_check
      %p729 = pneg %p728
    $region42: #{guided_attention_apply.1} parent=5 // pred_check_branch
      %731 = sbr.rel (%p729) target = $region44
    $region43: #{guided_attention_apply.1} parent=5 // pred_region
      %s732 = ssub.s32 %s10, 2
      // Predicated region
      $region45: #{guided_attention_apply.1} parent=43 // pred_check
        %p733 = pneg %p151
      $region46: #{guided_attention_apply.1} parent=43 // pred_check_branch
        %735 = sbr.rel (%p733) target = $region48
      $region47: #{guided_attention_apply.1} parent=43 // pred_region
        %s736 = smul.u32 2, %s22
        %p737 = scmp.lt.s32.totalorder %s21, 1
        %s738 = scalar_select %p737, %s21, 1
        %p739 = scmp.lt.s32.totalorder %s736, 1
        %s740 = scalar_select %p739, %s736, 1
        %s741 = smul.addr %s738, 32
        %s742 = sadd.s32 %s740, %s741
        %s743 = smul.addr %s742, 8
        %s744 = scalar_lea.vmem %s4, %s743
      $region48: #{guided_attention_apply.1} parent=43 // pred_fallthru
        _
    $region44: #{guided_attention_apply.1} parent=5 // pred_fallthru
      _
  $region6: #{guided_attention_apply.1} parent=0 // loop_footer
    %s14 = sadd.s32 1, %s10
  $region7: #{guided_attention_apply.1} parent=0 // loop_footer_branch
    %9 = sbr.rel target = $region3
  $region8: #{guided_attention_apply.1} parent=0 // loop_exit
    _

</llo_original>
